<compile_context>
chip_gen: v6e
topology: v6e:2x2x1
jax: 0.10.0
libtpu: 0.0.40
codegen_flags: <defaults>
</compile_context>

<pallas_src>
import functools
import math

import jax
import jax.numpy as jnp
from jax.experimental import pallas as pl
from jax.experimental.pallas import tpu as pltpu


_TARGET_F32_BLOCK_BYTES = 2 << 20     # ~2 MiB f32 working set per block
_MIN_STEPS = 8                        # keep the pipeline (and megacore) busy
_VMEM_LIMIT_BYTES = 48 << 20          # explicit: fits v5e/v6e, 75% of v7x VMEM
_KP = 128                             # padded segment count (lane-aligned)


def _round_down(x, m):
    return (x // m) * m


def _row_tile(rows, row_f32_bytes):
    """Row tile: multiple of 8, sized by f32 working set, >= _MIN_STEPS grid steps."""
    tm = max(8, _TARGET_F32_BLOCK_BYTES // max(1, row_f32_bytes))
    if rows >= _MIN_STEPS * 8:
        tm = min(tm, max(8, _round_down(rows // _MIN_STEPS, 8)))
    if rows <= 8:
        return rows
    tm = min(tm, rows)
    return max(8, _round_down(tm, 8))


def _col_tile(cols, col_f32_bytes, batch):
    """Column tile: multiple of 128, sized by f32 working set, keeps grid steps up."""
    if cols <= 128:
        return cols
    t = max(128, _round_down(_TARGET_F32_BLOCK_BYTES // max(1, col_f32_bytes), 128))
    steps_per_batch = pl.cdiv(_MIN_STEPS, batch)
    if cols >= steps_per_batch * 128:
        t = min(t, max(128, _round_down(cols // steps_per_batch, 128)))
    return min(t, cols)


# ---------------------------------------------------------------------------
# channels_last, packed path (small C packed to a lane-dense row)
# ---------------------------------------------------------------------------
def _ln_last_packed_kernel(x_ref, w_ref, b_ref, s_ref, st_ref, o_ref, *, eps, inv_c):
    x = x_ref[...].astype(jnp.float32)                  # (TM, Cp), lane-dense
    s = s_ref[...]                                      # (Cp, KP) 0/1 f32
    st = st_ref[...]                                    # (KP, Cp)
    # Segment (per logical row) mean via MXU; columns >= K of s are zero.
    mean = jnp.dot(x, s, preferred_element_type=jnp.float32) * inv_c      # (TM, KP)
    mean_b = jnp.dot(mean, st, preferred_element_type=jnp.float32)        # (TM, Cp)
    xc = x - mean_b
    var = jnp.dot(xc * xc, s, preferred_element_type=jnp.float32) * inv_c  # (TM, KP)
    inv = jax.lax.rsqrt(var + eps)
    inv_b = jnp.dot(inv, st, preferred_element_type=jnp.float32)          # (TM, Cp)
    y = xc * inv_b * w_ref[...] + b_ref[...]
    o_ref[...] = y.astype(o_ref.dtype)


# ---------------------------------------------------------------------------
# channels_last, generic fallback (C already lane-dense or not packable)
# ---------------------------------------------------------------------------
def _ln_last_kernel(x_ref, w_ref, b_ref, o_ref, *, eps):
    x = x_ref[...].astype(jnp.float32)                  # (TM, C)
    mean = jnp.mean(x, axis=-1, keepdims=True)
    xc = x - mean
    var = jnp.mean(xc * xc, axis=-1, keepdims=True)
    inv = jax.lax.rsqrt(var + eps)
    y = xc * inv * w_ref[...] + b_ref[...]
    o_ref[...] = y.astype(o_ref.dtype)


def layer_norm_channels_last(x, weight, bias, eps=1e-6):
    """LayerNorm over the trailing dim of x (any rank), F.layer_norm semantics."""
    orig_shape = x.shape
    C = orig_shape[-1]
    R = 1
    for d in orig_shape[:-1]:
        R *= d
    x2 = x.reshape(R, C)                                # contiguous -> free reshape
    w_f32 = weight.astype(jnp.float32)
    b_f32 = bias.astype(jnp.float32)

    cp = C * 128 // math.gcd(C, 128)                    # lcm(C, 128)
    k = cp // C
    can_pack = (C % 128 != 0) and (cp <= 512) and (R % k == 0) and (R // k >= 1)

    cparams = pltpu.CompilerParams(
        dimension_semantics=("parallel",), vmem_limit_bytes=_VMEM_LIMIT_BYTES)
    nelem = R * C
    cost = pl.CostEstimate(flops=10 * nelem, transcendentals=R,
                           bytes_accessed=2 * nelem * x.dtype.itemsize)

    if can_pack:
        rp = R // k
        xk = x2.reshape(rp, cp)                         # pack k rows per physical row
        w_in = jnp.tile(w_f32, k).reshape(1, cp)
        b_in = jnp.tile(b_f32, k).reshape(1, cp)
        seg_ids = jnp.arange(cp, dtype=jnp.int32) // C
        seg = (seg_ids[:, None] == jnp.arange(_KP, dtype=jnp.int32)[None, :]
               ).astype(jnp.float32)                    # (cp, KP) 0/1 block matrix
        seg_t = seg.T                                   # (KP, cp)

        tm = _row_tile(rp, cp * 4)
        grid = (pl.cdiv(rp, tm),)
        out = pl.pallas_call(
            functools.partial(_ln_last_packed_kernel, eps=float(eps), inv_c=1.0 / C),
            out_shape=jax.ShapeDtypeStruct((rp, cp), x.dtype),
            grid=grid,
            in_specs=[
                pl.BlockSpec((tm, cp), lambda i: (i, 0)),
                pl.BlockSpec((1, cp), lambda i: (0, 0)),
                pl.BlockSpec((1, cp), lambda i: (0, 0)),
                pl.BlockSpec((cp, _KP), lambda i: (0, 0)),
                pl.BlockSpec((_KP, cp), lambda i: (0, 0)),
            ],
            out_specs=pl.BlockSpec((tm, cp), lambda i: (i, 0)),
            compiler_params=cparams,
            cost_estimate=cost,
        )(xk, w_in, b_in, seg, seg_t)
        return out.reshape(orig_shape)

    # Fallback: full C as the lane dim (dense when C % 128 == 0).
    tm = _row_tile(R, C * 4)
    grid = (pl.cdiv(R, tm),)
    out = pl.pallas_call(
        functools.partial(_ln_last_kernel, eps=float(eps)),
        out_shape=jax.ShapeDtypeStruct((R, C), x.dtype),
        grid=grid,
        in_specs=[
            pl.BlockSpec((tm, C), lambda i: (i, 0)),
            pl.BlockSpec((1, C), lambda i: (0, 0)),
            pl.BlockSpec((1, C), lambda i: (0, 0)),
        ],
        out_specs=pl.BlockSpec((tm, C), lambda i: (i, 0)),
        compiler_params=cparams,
        cost_estimate=cost,
    )(x2, w_f32.reshape(1, C), b_f32.reshape(1, C))
    return out.reshape(orig_shape)


# ---------------------------------------------------------------------------
# channels_first
# ---------------------------------------------------------------------------
def _ln_first_kernel(x_ref, w_ref, b_ref, o_ref, *, eps, inv_c):
    x = x_ref[...].astype(jnp.float32)                  # (C, T), T lane-dense
    mean = jnp.sum(x, axis=0, keepdims=True) * inv_c    # (1, T) — plane adds (VPU)
    msq = jnp.sum(x * x, axis=0, keepdims=True) * inv_c
    var = msq - mean * mean                             # fused one-pass stats
    inv = jax.lax.rsqrt(var + eps)
    y = (x - mean) * inv * w_ref[...] + b_ref[...]      # w/b are (C, 1)
    o_ref[...] = y.astype(o_ref.dtype)


def layer_norm_channels_first(x, weight, bias, eps=1e-6):
    """LayerNorm over dim 1 of NCHW x, matching the PyTorch channels_first branch."""
    B, C, H, W = x.shape
    HW = H * W
    x3 = x.reshape(B, C, HW)                            # free reshape; lane-dense cols

    T = _col_tile(HW, C * 4, B)
    grid = (B, pl.cdiv(HW, T))

    w2 = weight.astype(jnp.float32).reshape(C, 1)
    b2 = bias.astype(jnp.float32).reshape(C, 1)

    nelem = B * C * HW
    cost = pl.CostEstimate(flops=7 * nelem, transcendentals=B * HW,
                           bytes_accessed=2 * nelem * x.dtype.itemsize)

    out = pl.pallas_call(
        functools.partial(_ln_first_kernel, eps=float(eps), inv_c=1.0 / C),
        out_shape=jax.ShapeDtypeStruct((B, C, HW), x.dtype),
        grid=grid,
        in_specs=[
            pl.BlockSpec((None, C, T), lambda b, s: (b, 0, s)),
            pl.BlockSpec((C, 1), lambda b, s: (0, 0)),
            pl.BlockSpec((C, 1), lambda b, s: (0, 0)),
        ],
        out_specs=pl.BlockSpec((None, C, T), lambda b, s: (b, 0, s)),
        compiler_params=pltpu.CompilerParams(
            dimension_semantics=("parallel", "parallel"),
            vmem_limit_bytes=_VMEM_LIMIT_BYTES),
        cost_estimate=cost,
    )(x3, w2, b2)
    return out.reshape(B, C, H, W)


def layer_norm(x, weight, bias, eps=1e-6, data_format="channels_last"):
    """Dispatch mirroring the PyTorch LayerNorm module's forward."""
    if data_format == "channels_last":
        return layer_norm_channels_last(x, weight, bias, eps)
    elif data_format == "channels_first":
        return layer_norm_channels_first(x, weight, bias, eps)
    raise NotImplementedError(data_format)


# ---------------------------------------------------------------------------
# Pure-JAX references (PyTorch semantics: biased variance, eps inside sqrt).
# ---------------------------------------------------------------------------
def _ref_channels_last(x, w, b, eps):
    u = jnp.mean(x, axis=-1, keepdims=True)
    s = jnp.mean((x - u) ** 2, axis=-1, keepdims=True)
    return (x - u) / jnp.sqrt(s + eps) * w + b


def _ref_channels_first(x, w, b, eps):
    u = jnp.mean(x, axis=1, keepdims=True)
    s = jnp.mean((x - u) ** 2, axis=1, keepdims=True)
    xn = (x - u) / jnp.sqrt(s + eps)
    return w[None, :, None, None] * xn + b[None, :, None, None]


if __name__ == "__main__":
    key = jax.random.PRNGKey(0)
    k1, k2, k3, k4, k5, k6, k7 = jax.random.split(key, 7)
    eps = 1e-6

    # ---- channels_last, small C (packed / segment-sum path) ----
    C = 32
    weight = 1.0 + 0.1 * jax.random.normal(k1, (C,), dtype=jnp.float32)
    bias = 0.1 * jax.random.normal(k2, (C,), dtype=jnp.float32)
    x_last = jax.random.normal(k3, (2, 16, 16, C), dtype=jnp.float32)
    out_last = jax.block_until_ready(
        layer_norm(x_last, weight, bias, eps, data_format="channels_last"))
    ref_last = _ref_channels_last(x_last, weight, bias, eps)
    assert out_last.shape == x_last.shape and out_last.dtype == x_last.dtype
    assert jnp.allclose(out_last, ref_last, atol=1e-5, rtol=1e-5), "channels_last(packed) mismatch"

    # ---- channels_last, lane-dense C (fallback path) ----
    C2 = 128
    weight2 = 1.0 + 0.1 * jax.random.normal(k4, (C2,), dtype=jnp.float32)
    bias2 = 0.1 * jax.random.normal(k5, (C2,), dtype=jnp.float32)
    x_last2 = jax.random.normal(k6, (2, 8, 8, C2), dtype=jnp.float32)
    out_last2 = jax.block_until_ready(
        layer_norm(x_last2, weight2, bias2, eps, data_format="channels_last"))
    ref_last2 = _ref_channels_last(x_last2, weight2, bias2, eps)
    assert out_last2.shape == x_last2.shape and out_last2.dtype == x_last2.dtype
    assert jnp.allclose(out_last2, ref_last2, atol=1e-5, rtol=1e-5), "channels_last(dense) mismatch"

    # ---- channels_first ----
    x_first = jax.random.normal(k7, (2, C, 16, 16), dtype=jnp.float32)
    out_first = jax.block_until_ready(
        layer_norm(x_first, weight, bias, eps, data_format="channels_first"))
    ref_first = _ref_channels_first(x_first, weight, bias, eps)
    assert out_first.shape == x_first.shape and out_first.dtype == x_first.dtype
    assert jnp.allclose(out_first, ref_first, atol=1e-5, rtol=1e-5), "channels_first mismatch"

    print("KERNEL_OK")
</pallas_src>

<mosaic_0001>
module attributes {stable_mosaic.version = 11 : i64} {
  func.func @_ln_last_packed_kernel(%arg0: i32, %arg1: memref<16x128xf32, #tpu.memory_space<vmem>>, %arg2: memref<1x128xf32, #tpu.memory_space<vmem>>, %arg3: memref<1x128xf32, #tpu.memory_space<vmem>>, %arg4: memref<128x128xf32, #tpu.memory_space<vmem>>, %arg5: memref<128x128xf32, #tpu.memory_space<vmem>>, %arg6: memref<16x128xf32, #tpu.memory_space<vmem>>) attributes {dimension_semantics = [#tpu.dimension_semantics<parallel>], iteration_bounds = array<i64: 8>, scalar_prefetch = 0 : i64, scratch_operands = 0 : i64, tpu.core_type = #tpu.core_type<tc>, window_params = [{transform_indices = @transform_0, window_bounds = array<i64: 16, 128>}, {pipeline_mode = #tpu.pipeline_mode<synchronous>, transform_indices = @transform_1, window_bounds = array<i64: 1, 128>}, {pipeline_mode = #tpu.pipeline_mode<synchronous>, transform_indices = @transform_2, window_bounds = array<i64: 1, 128>}, {pipeline_mode = #tpu.pipeline_mode<synchronous>, transform_indices = @transform_3, window_bounds = array<i64: 128, 128>}, {pipeline_mode = #tpu.pipeline_mode<synchronous>, transform_indices = @transform_4, window_bounds = array<i64: 128, 128>}, {transform_indices = @transform_5, window_bounds = array<i64: 16, 128>}]} {
    %c0 = arith.constant 0 : index
    %c0_0 = arith.constant 0 : index
    %0 = vector.load %arg1[%c0, %c0_0] : memref<16x128xf32, #tpu.memory_space<vmem>>, vector<16x128xf32>
    %c0_1 = arith.constant 0 : index
    %c0_2 = arith.constant 0 : index
    %1 = vector.load %arg4[%c0_1, %c0_2] : memref<128x128xf32, #tpu.memory_space<vmem>>, vector<128x128xf32>
    %c0_3 = arith.constant 0 : index
    %c0_4 = arith.constant 0 : index
    %2 = vector.load %arg5[%c0_3, %c0_4] : memref<128x128xf32, #tpu.memory_space<vmem>>, vector<128x128xf32>
    %cst = arith.constant dense<0.000000e+00> : vector<16x128xf32>
    %3 = tpu.matmul %0, %1, %cst {dimension_numbers = #tpu.dot_dimension_numbers<[1], [0], [0], [1], [0, 0, 1, 1], [], []>} : vector<16x128xf32>, vector<128x128xf32>, vector<16x128xf32> -> vector<16x128xf32>
    %cst_5 = arith.constant 3.125000e-02 : f32
    %4 = vector.broadcast %cst_5 : f32 to vector<16x128xf32>
    %5 = arith.mulf %3, %4 : vector<16x128xf32>
    %cst_6 = arith.constant dense<0.000000e+00> : vector<16x128xf32>
    %6 = tpu.matmul %5, %2, %cst_6 {dimension_numbers = #tpu.dot_dimension_numbers<[1], [0], [0], [1], [0, 0, 1, 1], [], []>} : vector<16x128xf32>, vector<128x128xf32>, vector<16x128xf32> -> vector<16x128xf32>
    %7 = arith.subf %0, %6 : vector<16x128xf32>
    %8 = arith.mulf %7, %7 : vector<16x128xf32>
    %cst_7 = arith.constant dense<0.000000e+00> : vector<16x128xf32>
    %9 = tpu.matmul %8, %1, %cst_7 {dimension_numbers = #tpu.dot_dimension_numbers<[1], [0], [0], [1], [0, 0, 1, 1], [], []>} : vector<16x128xf32>, vector<128x128xf32>, vector<16x128xf32> -> vector<16x128xf32>
    %cst_8 = arith.constant 3.125000e-02 : f32
    %10 = vector.broadcast %cst_8 : f32 to vector<16x128xf32>
    %11 = arith.mulf %9, %10 : vector<16x128xf32>
    %cst_9 = arith.constant 9.99999997E-7 : f32
    %12 = vector.broadcast %cst_9 : f32 to vector<16x128xf32>
    %13 = arith.addf %11, %12 : vector<16x128xf32>
    %14 = math.rsqrt %13 : vector<16x128xf32>
    %cst_10 = arith.constant dense<0.000000e+00> : vector<16x128xf32>
    %15 = tpu.matmul %14, %2, %cst_10 {dimension_numbers = #tpu.dot_dimension_numbers<[1], [0], [0], [1], [0, 0, 1, 1], [], []>} : vector<16x128xf32>, vector<128x128xf32>, vector<16x128xf32> -> vector<16x128xf32>
    %16 = arith.mulf %7, %15 : vector<16x128xf32>
    %c0_11 = arith.constant 0 : index
    %c0_12 = arith.constant 0 : index
    %17 = vector.load %arg2[%c0_11, %c0_12] : memref<1x128xf32, #tpu.memory_space<vmem>>, vector<1x128xf32>
    %18 = vector.broadcast %17 : vector<1x128xf32> to vector<16x128xf32>
    %19 = arith.mulf %16, %18 : vector<16x128xf32>
    %c0_13 = arith.constant 0 : index
    %c0_14 = arith.constant 0 : index
    %20 = vector.load %arg3[%c0_13, %c0_14] : memref<1x128xf32, #tpu.memory_space<vmem>>, vector<1x128xf32>
    %21 = vector.broadcast %20 : vector<1x128xf32> to vector<16x128xf32>
    %22 = arith.addf %19, %21 : vector<16x128xf32>
    %c0_15 = arith.constant 0 : index
    %c0_16 = arith.constant 0 : index
    %23 = vector.load %arg6[%c0_15, %c0_16] : memref<16x128xf32, #tpu.memory_space<vmem>>, vector<16x128xf32>
    tpu.vector_store %arg6[%c0_15, %c0_16], %22 {strides = array<i32>} : memref<16x128xf32, #tpu.memory_space<vmem>>, vector<16x128xf32>,
    return
  }
  func.func @transform_0(%arg0: i32) -> (i32, i32) {
    %c0_i32 = arith.constant 0 : i32
    %c0_i32_0 = arith.constant 0 : i32
    return %arg0, %c0_i32 : i32, i32
  }
  func.func @transform_1(%arg0: i32) -> (i32, i32) {
    %c0_i32 = arith.constant 0 : i32
    %c0_i32_0 = arith.constant 0 : i32
    %c0_i32_1 = arith.constant 0 : i32
    return %c0_i32, %c0_i32_0 : i32, i32
  }
  func.func @transform_2(%arg0: i32) -> (i32, i32) {
    %c0_i32 = arith.constant 0 : i32
    %c0_i32_0 = arith.constant 0 : i32
    %c0_i32_1 = arith.constant 0 : i32
    return %c0_i32, %c0_i32_0 : i32, i32
  }
  func.func @transform_3(%arg0: i32) -> (i32, i32) {
    %c0_i32 = arith.constant 0 : i32
    %c0_i32_0 = arith.constant 0 : i32
    %c0_i32_1 = arith.constant 0 : i32
    return %c0_i32, %c0_i32_0 : i32, i32
  }
  func.func @transform_4(%arg0: i32) -> (i32, i32) {
    %c0_i32 = arith.constant 0 : i32
    %c0_i32_0 = arith.constant 0 : i32
    %c0_i32_1 = arith.constant 0 : i32
    return %c0_i32, %c0_i32_0 : i32, i32
  }
  func.func @transform_5(%arg0: i32) -> (i32, i32) {
    %c0_i32 = arith.constant 0 : i32
    %c0_i32_0 = arith.constant 0 : i32
    return %arg0, %c0_i32 : i32, i32
  }
}

</mosaic_0001>

<llo_original>
// kernel: tpu_custom_call.1
$region0: #{tpu_custom_call.1}
  #allocation0 [shape = 'u32[]', space=smem, size = 0x4, offset = 0x4, fixed_abs, tag = 'smem constant byte address 0x4 - core index']
  #allocation1 [shape = 'u32[144,128]{1,0:T(1,128)}', space=vmem, size = 0x12000, scoped, tag = 'internal scratch']
  %s0 = inlined_call_operand.hbm [shape: f32[128,128], index: 0, kind: input, shape index: {}]
  %s1 = inlined_call_operand.vmem [shape: f32[1,128], index: 1, kind: input, shape index: {}]
  %s2 = inlined_call_operand.vmem [shape: f32[1,128], index: 2, kind: input, shape index: {}]
  %s3 = inlined_call_operand.hbm [shape: f32[128,128], index: 3, kind: input, shape index: {}]
  %s4 = inlined_call_operand.hbm [shape: f32[128,128], index: 4, kind: input, shape index: {}]
  %s5 = inlined_call_operand.hbm [shape: f32[128,128], index: 5, kind: output, shape index: {}]
  %s6 = sld [smem:[#allocation0]]
  $region65: #{tpu_custom_call.1} parent=0
    _
  %s8 = ssub.s32 1, %s6
  %s9 = scalar_select 0, %s8, %s6
  $region1: #{tpu_custom_call.1} parent=0
    #allocation2 [shape = 'u8[16384]{0}', space=vmem, size = 0x4000, scoped, tag = 'input window, operand 0']
    #allocation3 [shape = 's32[2]{0}', space=sflag, size = 0x8, scoped, tag = 'scoped memory for tpu_custom_call.1']
    #allocation4 [shape = 's32[2]{0}', space=sflag, size = 0x8, scoped, tag = 'scoped memory for tpu_custom_call.1']
    #allocation5 [shape = 'u8[65536]{0}', space=vmem, size = 0x10000, scoped, tag = 'input window, operand 3, single buffered']
    #allocation6 [shape = 's32[1]{0}', space=sflag, size = 0x4, scoped, tag = 'scoped memory for tpu_custom_call.1']
    #allocation7 [shape = 'u8[65536]{0}', space=vmem, size = 0x10000, scoped, tag = 'input window, operand 4, single buffered']
    #allocation8 [shape = 'u8[16384]{0}', space=vmem, size = 0x4000, scoped, tag = 'output window, operand 0']
    %10 = vsyncpa [#allocation3], 0
    %s11 = scalar_lea.sflag [#allocation3], 1
    %12 = vsyncpa %s11, 0
    %13 = vsyncpa [#allocation6], 0
    %14 = vsyncpa [#allocation4], 0
    %s15 = scalar_lea.sflag [#allocation4], 1
    %16 = vsyncpa %s15, 0
    loop: start=0, step=1, limit=10
    $region2: #{tpu_custom_call.1} parent=1 // loop_pre_header
      _
    $region3: #{tpu_custom_call.1} parent=1 // loop_header
      %s18 = sphi 0, %s22
      %p19 = scmp.ge.s32.totalorder %s18, 10
      %s28 = sphi 0, %s30
      %s31 = sphi 0, %s28
      %s32 = sphi 0, %s31
      %s48 = sphi 0, %s32
      %s52 = sphi 0, %s52
      %s54 = sphi 0, %s52
      %s55 = sphi 0, %s54
      %s69 = sphi 0, %s55
      %s73 = sphi 0, %s73
      %s75 = sphi 0, %s73
      %s76 = sphi 0, %s75
      %s90 = sphi 0, %s76
      %s94 = sphi 0, %s94
      %s96 = sphi 0, %s94
      %s97 = sphi 0, %s96
      %s111 = sphi 0, %s97
      %s115 = sphi 0, %s115
      %s117 = sphi 0, %s115
      %s118 = sphi 0, %s117
      %s132 = sphi 0, %s118
      %s138 = sphi 0, %s140
      %s141 = sphi 0, %s138
      %s142 = sphi 0, %s141
      %s158 = sphi 0, %s142
    $region4: #{tpu_custom_call.1} parent=1 // loop_header_branch
      %21 = sbr.rel (%p19) target = $region8
    $region5: #{tpu_custom_call.1} parent=1 // loop_body
      %s23 = ssub.s32 %s18, 1
      %s24 = ssub.s32 %s18, 2
      %s25 = sadd.s32 %s18, 1
      %s26 = ssub.s32 %s18, %s25
      %p27 = scmp.eq.s32.totalorder %s26, 0
      %s29 = sadd.s32 %s28, 1
      %s30 = scalar_select %p27, %s28, %s29
      %p33 = pneg %p27
      %p34 = scmp.eq.s32.totalorder %s18, 7
      %p35 = por %p33, %p34
      %p36 = scmp.ne.s32.totalorder %s28, %s31
      %p37 = scmp.eq.s32.totalorder %s18, 0
      %p38 = por %p36, %p37
      %p39 = scmp.ne.s32.totalorder %s28, %s31
      %p40 = scmp.eq.s32.totalorder %s23, 7
      %p41 = por %p39, %p40
      %p42 = scmp.ne.s32.totalorder %s31, %s32
      %p43 = scmp.eq.s32.totalorder %s23, 0
      %p44 = por %p42, %p43
      %p45 = scmp.ne.s32.totalorder %s31, %s32
      %p46 = scmp.eq.s32.totalorder %s24, 7
      %p47 = por %p45, %p46
      %p49 = scmp.ne.s32.totalorder %s32, %s48
      %p50 = scmp.eq.s32.totalorder %s24, 0
      %p51 = por %p49, %p50
      %s53 = sadd.s32 %s52, 1
      %p56 = scmp.eq.s32.totalorder %s18, 7
      %p57 = scmp.ne.s32.totalorder %s52, %s54
      %p58 = scmp.eq.s32.totalorder %s18, 0
      %p59 = por %p57, %p58
      %p60 = scmp.ne.s32.totalorder %s52, %s54
      %p61 = scmp.eq.s32.totalorder %s23, 7
      %p62 = por %p60, %p61
      %p63 = scmp.ne.s32.totalorder %s54, %s55
      %p64 = scmp.eq.s32.totalorder %s23, 0
      %p65 = por %p63, %p64
      %p66 = scmp.ne.s32.totalorder %s54, %s55
      %p67 = scmp.eq.s32.totalorder %s24, 7
      %p68 = por %p66, %p67
      %p70 = scmp.ne.s32.totalorder %s55, %s69
      %p71 = scmp.eq.s32.totalorder %s24, 0
      %p72 = por %p70, %p71
      %s74 = sadd.s32 %s73, 1
      %p77 = scmp.eq.s32.totalorder %s18, 7
      %p78 = scmp.ne.s32.totalorder %s73, %s75
      %p79 = scmp.eq.s32.totalorder %s18, 0
      %p80 = por %p78, %p79
      %p81 = scmp.ne.s32.totalorder %s73, %s75
      %p82 = scmp.eq.s32.totalorder %s23, 7
      %p83 = por %p81, %p82
      %p84 = scmp.ne.s32.totalorder %s75, %s76
      %p85 = scmp.eq.s32.totalorder %s23, 0
      %p86 = por %p84, %p85
      %p87 = scmp.ne.s32.totalorder %s75, %s76
      %p88 = scmp.eq.s32.totalorder %s24, 7
      %p89 = por %p87, %p88
      %p91 = scmp.ne.s32.totalorder %s76, %s90
      %p92 = scmp.eq.s32.totalorder %s24, 0
      %p93 = por %p91, %p92
      %s95 = sadd.s32 %s94, 1
      %p98 = scmp.eq.s32.totalorder %s18, 7
      %p99 = scmp.ne.s32.totalorder %s94, %s96
      %p100 = scmp.eq.s32.totalorder %s18, 0
      %p101 = por %p99, %p100
      %p102 = scmp.ne.s32.totalorder %s94, %s96
      %p103 = scmp.eq.s32.totalorder %s23, 7
      %p104 = por %p102, %p103
      %p105 = scmp.ne.s32.totalorder %s96, %s97
      %p106 = scmp.eq.s32.totalorder %s23, 0
      %p107 = por %p105, %p106
      %p108 = scmp.ne.s32.totalorder %s96, %s97
      %p109 = scmp.eq.s32.totalorder %s24, 7
      %p110 = por %p108, %p109
      %p112 = scmp.ne.s32.totalorder %s97, %s111
      %p113 = scmp.eq.s32.totalorder %s24, 0
      %p114 = por %p112, %p113
      %s116 = sadd.s32 %s115, 1
      %p119 = scmp.eq.s32.totalorder %s18, 7
      %p120 = scmp.ne.s32.totalorder %s115, %s117
      %p121 = scmp.eq.s32.totalorder %s18, 0
      %p122 = por %p120, %p121
      %p123 = scmp.ne.s32.totalorder %s115, %s117
      %p124 = scmp.eq.s32.totalorder %s23, 7
      %p125 = por %p123, %p124
      %p126 = scmp.ne.s32.totalorder %s117, %s118
      %p127 = scmp.eq.s32.totalorder %s23, 0
      %p128 = por %p126, %p127
      %p129 = scmp.ne.s32.totalorder %s117, %s118
      %p130 = scmp.eq.s32.totalorder %s24, 7
      %p131 = por %p129, %p130
      %p133 = scmp.ne.s32.totalorder %s118, %s132
      %p134 = scmp.eq.s32.totalorder %s24, 0
      %p135 = por %p133, %p134
      %s136 = ssub.s32 %s18, %s25
      %p137 = scmp.eq.s32.totalorder %s136, 0
      %s139 = sadd.s32 %s138, 1
      %s140 = scalar_select %p137, %s138, %s139
      %p143 = pneg %p137
      %p144 = scmp.eq.s32.totalorder %s18, 7
      %p145 = por %p143, %p144
      %p146 = scmp.ne.s32.totalorder %s138, %s141
      %p147 = scmp.eq.s32.totalorder %s18, 0
      %p148 = por %p146, %p147
      %p149 = scmp.ne.s32.totalorder %s138, %s141
      %p150 = scmp.eq.s32.totalorder %s23, 7
      %p151 = por %p149, %p150
      %p152 = scmp.ne.s32.totalorder %s141, %s142
      %p153 = scmp.eq.s32.totalorder %s23, 0
      %p154 = por %p152, %p153
      %p155 = scmp.ne.s32.totalorder %s141, %s142
      %p156 = scmp.eq.s32.totalorder %s24, 7
      %p157 = por %p155, %p156
      %p159 = scmp.ne.s32.totalorder %s142, %s158
      %p160 = scmp.eq.s32.totalorder %s24, 0
      %p161 = por %p159, %p160
      %p162 = scmp.le.s32.totalorder 1, %s18
      %p163 = scmp.lt.s32.totalorder %s18, 9
      %p164 = pnand %p162, %p163
      %p165 = pneg %p164
      // Predicated region
      $region9: #{tpu_custom_call.1} parent=5 // pred_check
        _
      $region10: #{tpu_custom_call.1} parent=5 // pred_check_branch
        %167 = sbr.rel (%p164) target = $region12
      $region11: #{tpu_custom_call.1} parent=5 // pred_region
        %s168 = ssub.s32 %s18, 1
        // Predicated region
        $region13: #{tpu_custom_call.1} parent=11 // pred_check
          %p169 = pneg %p65
        $region14: #{tpu_custom_call.1} parent=11 // pred_check_branch
          %171 = sbr.rel (%p169) target = $region16
        $region15: #{tpu_custom_call.1} parent=11 // pred_region
          _
        $region16: #{tpu_custom_call.1} parent=11 // pred_fallthru
          _
        // Predicated region
        $region17: #{tpu_custom_call.1} parent=11 // pred_check
          %p172 = pneg %p86
        $region18: #{tpu_custom_call.1} parent=11 // pred_check_branch
          %174 = sbr.rel (%p172) target = $region20
        $region19: #{tpu_custom_call.1} parent=11 // pred_region
          _
        $region20: #{tpu_custom_call.1} parent=11 // pred_fallthru
          _
        // Predicated region
        $region21: #{tpu_custom_call.1} parent=11 // pred_check
          %p175 = pneg %p107
        $region22: #{tpu_custom_call.1} parent=11 // pred_check_branch
          %177 = sbr.rel (%p175) target = $region24
        $region23: #{tpu_custom_call.1} parent=11 // pred_region
          %s179 = ssub.s32 2048, 2048
          %180 = vsyncadd [#allocation6], %s179
          %s181 = sshll.u32 [#allocation5], 4
          %s182 = int_to_ptr.vmem [resolvable:$true] %s181
          %187 = dma.hbm_to_vmem [thread:$0]  %s3, 2048, %s182, [#allocation6], 128, 128, 8
        $region24: #{tpu_custom_call.1} parent=11 // pred_fallthru
          _
        // Predicated region
        $region25: #{tpu_custom_call.1} parent=11 // pred_check
          %p188 = pneg %p128
        $region26: #{tpu_custom_call.1} parent=11 // pred_check_branch
          %190 = sbr.rel (%p188) target = $region28
        $region27: #{tpu_custom_call.1} parent=11 // pred_region
          %s192 = ssub.s32 2048, 2048
          %193 = vsyncadd [#allocation6], %s192
          %s194 = sshll.u32 [#allocation7], 4
          %s195 = int_to_ptr.vmem [resolvable:$true] %s194
          %200 = dma.hbm_to_vmem [thread:$0]  %s4, 2048, %s195, [#allocation6], 128, 128, 8
        $region28: #{tpu_custom_call.1} parent=11 // pred_fallthru
          _
      $region12: #{tpu_custom_call.1} parent=5 // pred_fallthru
        _
      %p201 = scmp.lt.s32.totalorder %s18, 8
      // Predicated region
      $region29: #{tpu_custom_call.1} parent=5 // pred_check
        %p202 = pneg %p201
      $region30: #{tpu_custom_call.1} parent=5 // pred_check_branch
        %204 = sbr.rel (%p202) target = $region32
      $region31: #{tpu_custom_call.1} parent=5 // pred_region
        // Predicated region
        $region33: #{tpu_custom_call.1} parent=31 // pred_check
          %p205 = pneg %p38
        $region34: #{tpu_custom_call.1} parent=31 // pred_check_branch
          %207 = sbr.rel (%p205) target = $region36
        $region35: #{tpu_custom_call.1} parent=31 // pred_region
          %s208 = sand.u32 %s28, 1
          %s209 = scalar_lea.sflag [#allocation3], %s208
          %s210 = sand.u32 %s28, 1
          %s211 = smul.addr %s210, 16
          %s212 = scalar_lea.vmem [#allocation2], %s211
          %s213 = smul.u32 2, %s18
          %s215 = ssub.s32 256, 256
          %216 = vsyncadd %s209, %s215
          %s217 = smul.addr %s213, 128
          %s218 = scalar_lea.hbm %s0, %s217
          %s219 = sshll.u32 %s212, 4
          %s220 = int_to_ptr.vmem [resolvable:$true] %s219
          %225 = dma.hbm_to_vmem [thread:$0]  %s218, 256, %s220, %s209, 128, 128, 8
        $region36: #{tpu_custom_call.1} parent=31 // pred_fallthru
          _
      $region32: #{tpu_custom_call.1} parent=5 // pred_fallthru
        _
      %p226 = scmp.le.s32.totalorder 1, %s18
      %p227 = scmp.lt.s32.totalorder %s18, 9
      %p228 = pnand %p226, %p227
      %p229 = pneg %p228
      // Predicated region
      $region37: #{tpu_custom_call.1} parent=5 // pred_check
        _
      $region38: #{tpu_custom_call.1} parent=5 // pred_check_branch
        %231 = sbr.rel (%p228) target = $region40
      $region39: #{tpu_custom_call.1} parent=5 // pred_region
        %s232 = ssub.s32 %s18, 1
        %s233 = sand.u32 %s31, 1
        %s234 = scalar_lea.sflag [#allocation3], %s233
        %s235 = sand.u32 %s31, 1
        %s236 = smul.addr %s235, 16
        %s237 = scalar_lea.vmem [#allocation2], %s236
        // Predicated region
        $region41: #{tpu_custom_call.1} parent=39 // pred_check
          %p238 = pneg %p44
        $region42: #{tpu_custom_call.1} parent=39 // pred_check_branch
          %240 = sbr.rel (%p238) target = $region44
        $region43: #{tpu_custom_call.1} parent=39 // pred_region
          %241 = dma.done %s234, 256
        $region44: #{tpu_custom_call.1} parent=39 // pred_fallthru
          _
        // Predicated region
        $region45: #{tpu_custom_call.1} parent=39 // pred_check
          %p242 = pneg %p107
        $region46: #{tpu_custom_call.1} parent=39 // pred_check_branch
          %244 = sbr.rel (%p242) target = $region48
        $region47: #{tpu_custom_call.1} parent=39 // pred_region
          %245 = dma.done [#allocation6], 2048
        $region48: #{tpu_custom_call.1} parent=39 // pred_fallthru
          _
        // Predicated region
        $region49: #{tpu_custom_call.1} parent=39 // pred_check
          %p246 = pneg %p128
        $region50: #{tpu_custom_call.1} parent=39 // pred_check_branch
          %248 = sbr.rel (%p246) target = $region52
        $region51: #{tpu_custom_call.1} parent=39 // pred_region
          %249 = dma.done [#allocation6], 2048
        $region52: #{tpu_custom_call.1} parent=39 // pred_fallthru
          _
        %s250 = sand.u32 %s31, 1
        %s251 = scalar_lea.sflag [#allocation3], %s250
        %s252 = sand.u32 %s31, 1
        %s253 = smul.addr %s252, 16
        %s254 = scalar_lea.vmem [#allocation2], %s253
        %p255 = pneg %p44
        %p256 = pneg %p41
        %p257 = pneg %p65
        %p258 = pneg %p62
        %p259 = pneg %p86
        %p260 = pneg %p83
        %p261 = pneg %p107
        %p262 = pneg %p104
        %p263 = pneg %p128
        %p264 = pneg %p125
        %p265 = pneg %p154
        %p266 = pneg %p151
        %s267 = sand.u32 %s141, 1
        %s268 = scalar_lea.sflag [#allocation4], %s267
        %s269 = sand.u32 %s141, 1
        %s270 = smul.addr %s269, 16
        %s271 = scalar_lea.vmem [#allocation8], %s270
        %s272 = smul.u32 2, %s23
        %s273 = smul.u32 2, %s23
        %v274 = vld [vmem:[%s237] sm:$0xff]
        %v275 = vld [vmem:[%s237 + $0x8] sm:$0xff]
        %v276 = vld [vmem:[#allocation5] sm:$0xff]
        %v277 = vld [vmem:[#allocation5 + $0x8] sm:$0xff]
        %v278 = vld [vmem:[#allocation5 + $0x10] sm:$0xff]
        %v279 = vld [vmem:[#allocation5 + $0x18] sm:$0xff]
        %v280 = vld [vmem:[#allocation5 + $0x20] sm:$0xff]
        %v281 = vld [vmem:[#allocation5 + $0x28] sm:$0xff]
        %v282 = vld [vmem:[#allocation5 + $0x30] sm:$0xff]
        %v283 = vld [vmem:[#allocation5 + $0x38] sm:$0xff]
        %v284 = vld [vmem:[#allocation5 + $0x40] sm:$0xff]
        %v285 = vld [vmem:[#allocation5 + $0x48] sm:$0xff]
        %v286 = vld [vmem:[#allocation5 + $0x50] sm:$0xff]
        %v287 = vld [vmem:[#allocation5 + $0x58] sm:$0xff]
        %v288 = vld [vmem:[#allocation5 + $0x60] sm:$0xff]
        %v289 = vld [vmem:[#allocation5 + $0x68] sm:$0xff]
        %v290 = vld [vmem:[#allocation5 + $0x70] sm:$0xff]
        %v291 = vld [vmem:[#allocation5 + $0x78] sm:$0xff]
        %v292 = vld [vmem:[#allocation7] sm:$0xff]
        %v293 = vld [vmem:[#allocation7 + $0x8] sm:$0xff]
        %v294 = vld [vmem:[#allocation7 + $0x10] sm:$0xff]
        %v295 = vld [vmem:[#allocation7 + $0x18] sm:$0xff]
        %v296 = vld [vmem:[#allocation7 + $0x20] sm:$0xff]
        %v297 = vld [vmem:[#allocation7 + $0x28] sm:$0xff]
        %v298 = vld [vmem:[#allocation7 + $0x30] sm:$0xff]
        %v299 = vld [vmem:[#allocation7 + $0x38] sm:$0xff]
        %v300 = vld [vmem:[#allocation7 + $0x40] sm:$0xff]
        %v301 = vld [vmem:[#allocation7 + $0x48] sm:$0xff]
        %v302 = vld [vmem:[#allocation7 + $0x50] sm:$0xff]
        %v303 = vld [vmem:[#allocation7 + $0x58] sm:$0xff]
        %v304 = vld [vmem:[#allocation7 + $0x60] sm:$0xff]
        %v305 = vld [vmem:[#allocation7 + $0x68] sm:$0xff]
        %v306 = vld [vmem:[#allocation7 + $0x70] sm:$0xff]
        %v307 = vld [vmem:[#allocation7 + $0x78] sm:$0xff]
        %308 = vmatprep.subr.mxu0 0.0
        %309 = vmatpush1.msra.mxu0 %v291
        %310 = vmatprep.subr.mxu0 0.0
        %311 = vmatpush1.msra.mxu0 %v290
        %312 = vmatprep.subr.mxu0 0.0
        %313 = vmatpush1.msra.mxu0 %v289
        %314 = vmatprep.subr.mxu0 0.0
        %315 = vmatpush1.msra.mxu0 %v288
        %316 = vmatprep.subr.mxu0 0.0
        %317 = vmatpush1.msra.mxu0 %v287
        %318 = vmatprep.subr.mxu0 0.0
        %319 = vmatpush1.msra.mxu0 %v286
        %320 = vmatprep.subr.mxu0 0.0
        %321 = vmatpush1.msra.mxu0 %v285
        %322 = vmatprep.subr.mxu0 0.0
        %323 = vmatpush1.msra.mxu0 %v284
        %324 = vmatprep.subr.mxu0 0.0
        %325 = vmatpush1.msra.mxu0 %v283
        %326 = vmatprep.subr.mxu0 0.0
        %327 = vmatpush1.msra.mxu0 %v282
        %328 = vmatprep.subr.mxu0 0.0
        %329 = vmatpush1.msra.mxu0 %v281
        %330 = vmatprep.subr.mxu0 0.0
        %331 = vmatpush1.msra.mxu0 %v280
        %332 = vmatprep.subr.mxu0 0.0
        %333 = vmatpush1.msra.mxu0 %v279
        %334 = vmatprep.subr.mxu0 0.0
        %335 = vmatpush1.msra.mxu0 %v278
        %336 = vmatprep.subr.mxu0 0.0
        %337 = vmatpush1.msra.mxu0 %v277
        %338 = vmatprep.subr.mxu0 0.0
        %339 = vmatpush1.msra.mxu0 %v276
        %340 = vmatprep.subr.mxu0 0.0
        %341 = vmatpush2.msra.mxu0 0.0
        %342 = vmatprep.subr.mxu0 0.0
        %343 = vmatpush2.msra.mxu0 0.0
        %344 = vmatprep.subr.mxu0 0.0
        %345 = vmatpush2.msra.mxu0 0.0
        %346 = vmatprep.subr.mxu0 0.0
        %347 = vmatpush2.msra.mxu0 0.0
        %348 = vmatprep.subr.mxu0 0.0
        %349 = vmatpush2.msra.mxu0 0.0
        %350 = vmatprep.subr.mxu0 0.0
        %351 = vmatpush2.msra.mxu0 0.0
        %352 = vmatprep.subr.mxu0 0.0
        %353 = vmatpush2.msra.mxu0 0.0
        %354 = vmatprep.subr.mxu0 0.0
        %355 = vmatpush2.msra.mxu0 0.0
        %356 = vmatprep.subr.mxu0 0.0
        %357 = vmatpush2.msra.mxu0 0.0
        %358 = vmatprep.subr.mxu0 0.0
        %359 = vmatpush2.msra.mxu0 0.0
        %360 = vmatprep.subr.mxu0 0.0
        %361 = vmatpush2.msra.mxu0 0.0
        %362 = vmatprep.subr.mxu0 0.0
        %363 = vmatpush2.msra.mxu0 0.0
        %364 = vmatprep.subr.mxu0 0.0
        %365 = vmatpush2.msra.mxu0 0.0
        %366 = vmatprep.subr.mxu0 0.0
        %367 = vmatpush2.msra.mxu0 0.0
        %368 = vmatprep.subr.mxu0 0.0
        %369 = vmatpush2.msra.mxu0 0.0
        %370 = vmatprep.subr.mxu0 0.0
        %371 = vmatpush2.msra.mxu0 0.0
        %372 = vmatprep.mubr.f32.mxu0 0.0
        %373 = vmatmul.mubr.f32.gmra.mxu0 %v274
        %v374 = vpop.f32.mrf.mxu0
        %v375 = vadd.f32 0.0, %v374
        %v376 = vpop.f32.mrf.mxu0
        %377 = vmatprep.mubr.f32.mxu0 0.0
        %378 = vmatmul.mubr.f32.gmra.mxu0 %v275
        %v379 = vpop.f32.mrf.mxu0
        %v380 = vadd.f32 0.0, %v379
        %v381 = vpop.f32.mrf.mxu0
        %382 = vdwg.mxu0
        %v383 = vmul.f32 %v375, 0.03125
        %v384 = vmul.f32 %v380, 0.03125
        %385 = vmatprep.subr.mxu0 0.0
        %386 = vmatpush1.msra.mxu0 %v307
        %387 = vmatprep.subr.mxu0 0.0
        %388 = vmatpush1.msra.mxu0 %v306
        %389 = vmatprep.subr.mxu0 0.0
        %390 = vmatpush1.msra.mxu0 %v305
        %391 = vmatprep.subr.mxu0 0.0
        %392 = vmatpush1.msra.mxu0 %v304
        %393 = vmatprep.subr.mxu0 0.0
        %394 = vmatpush1.msra.mxu0 %v303
        %395 = vmatprep.subr.mxu0 0.0
        %396 = vmatpush1.msra.mxu0 %v302
        %397 = vmatprep.subr.mxu0 0.0
        %398 = vmatpush1.msra.mxu0 %v301
        %399 = vmatprep.subr.mxu0 0.0
        %400 = vmatpush1.msra.mxu0 %v300
        %401 = vmatprep.subr.mxu0 0.0
        %402 = vmatpush1.msra.mxu0 %v299
        %403 = vmatprep.subr.mxu0 0.0
        %404 = vmatpush1.msra.mxu0 %v298
        %405 = vmatprep.subr.mxu0 0.0
        %406 = vmatpush1.msra.mxu0 %v297
        %407 = vmatprep.subr.mxu0 0.0
        %408 = vmatpush1.msra.mxu0 %v296
        %409 = vmatprep.subr.mxu0 0.0
        %410 = vmatpush1.msra.mxu0 %v295
        %411 = vmatprep.subr.mxu0 0.0
        %412 = vmatpush1.msra.mxu0 %v294
        %413 = vmatprep.subr.mxu0 0.0
        %414 = vmatpush1.msra.mxu0 %v293
        %415 = vmatprep.subr.mxu0 0.0
        %416 = vmatpush1.msra.mxu0 %v292
        %417 = vmatprep.subr.mxu0 0.0
        %418 = vmatpush2.msra.mxu0 0.0
        %419 = vmatprep.subr.mxu0 0.0
        %420 = vmatpush2.msra.mxu0 0.0
        %421 = vmatprep.subr.mxu0 0.0
        %422 = vmatpush2.msra.mxu0 0.0
        %423 = vmatprep.subr.mxu0 0.0
        %424 = vmatpush2.msra.mxu0 0.0
        %425 = vmatprep.subr.mxu0 0.0
        %426 = vmatpush2.msra.mxu0 0.0
        %427 = vmatprep.subr.mxu0 0.0
        %428 = vmatpush2.msra.mxu0 0.0
        %429 = vmatprep.subr.mxu0 0.0
        %430 = vmatpush2.msra.mxu0 0.0
        %431 = vmatprep.subr.mxu0 0.0
        %432 = vmatpush2.msra.mxu0 0.0
        %433 = vmatprep.subr.mxu0 0.0
        %434 = vmatpush2.msra.mxu0 0.0
        %435 = vmatprep.subr.mxu0 0.0
        %436 = vmatpush2.msra.mxu0 0.0
        %437 = vmatprep.subr.mxu0 0.0
        %438 = vmatpush2.msra.mxu0 0.0
        %439 = vmatprep.subr.mxu0 0.0
        %440 = vmatpush2.msra.mxu0 0.0
        %441 = vmatprep.subr.mxu0 0.0
        %442 = vmatpush2.msra.mxu0 0.0
        %443 = vmatprep.subr.mxu0 0.0
        %444 = vmatpush2.msra.mxu0 0.0
        %445 = vmatprep.subr.mxu0 0.0
        %446 = vmatpush2.msra.mxu0 0.0
        %447 = vmatprep.subr.mxu0 0.0
        %448 = vmatpush2.msra.mxu0 0.0
        %449 = vmatprep.mubr.f32.mxu0 0.0
        %450 = vmatmul.mubr.f32.gmra.mxu0 %v383
        %v451 = vpop.f32.mrf.mxu0
        %v452 = vadd.f32 0.0, %v451
        %v453 = vpop.f32.mrf.mxu0
        %454 = vmatprep.mubr.f32.mxu0 0.0
        %455 = vmatmul.mubr.f32.gmra.mxu0 %v384
        %v456 = vpop.f32.mrf.mxu0
        %v457 = vadd.f32 0.0, %v456
        %v458 = vpop.f32.mrf.mxu0
        %459 = vdwg.mxu0
        %v460 = vsub.f32 %v274, %v452
        %v461 = vsub.f32 %v275, %v457
        %v462 = vmul.f32 %v460, %v460
        %v463 = vmul.f32 %v461, %v461
        %464 = vmatprep.subr.mxu0 0.0
        %465 = vmatpush1.msra.mxu0 %v291
        %466 = vmatprep.subr.mxu0 0.0
        %467 = vmatpush1.msra.mxu0 %v290
        %468 = vmatprep.subr.mxu0 0.0
        %469 = vmatpush1.msra.mxu0 %v289
        %470 = vmatprep.subr.mxu0 0.0
        %471 = vmatpush1.msra.mxu0 %v288
        %472 = vmatprep.subr.mxu0 0.0
        %473 = vmatpush1.msra.mxu0 %v287
        %474 = vmatprep.subr.mxu0 0.0
        %475 = vmatpush1.msra.mxu0 %v286
        %476 = vmatprep.subr.mxu0 0.0
        %477 = vmatpush1.msra.mxu0 %v285
        %478 = vmatprep.subr.mxu0 0.0
        %479 = vmatpush1.msra.mxu0 %v284
        %480 = vmatprep.subr.mxu0 0.0
        %481 = vmatpush1.msra.mxu0 %v283
        %482 = vmatprep.subr.mxu0 0.0
        %483 = vmatpush1.msra.mxu0 %v282
        %484 = vmatprep.subr.mxu0 0.0
        %485 = vmatpush1.msra.mxu0 %v281
        %486 = vmatprep.subr.mxu0 0.0
        %487 = vmatpush1.msra.mxu0 %v280
        %488 = vmatprep.subr.mxu0 0.0
        %489 = vmatpush1.msra.mxu0 %v279
        %490 = vmatprep.subr.mxu0 0.0
        %491 = vmatpush1.msra.mxu0 %v278
        %492 = vmatprep.subr.mxu0 0.0
        %493 = vmatpush1.msra.mxu0 %v277
        %494 = vmatprep.subr.mxu0 0.0
        %495 = vmatpush1.msra.mxu0 %v276
        %496 = vmatprep.subr.mxu0 0.0
        %497 = vmatpush2.msra.mxu0 0.0
        %498 = vmatprep.subr.mxu0 0.0
        %499 = vmatpush2.msra.mxu0 0.0
        %500 = vmatprep.subr.mxu0 0.0
        %501 = vmatpush2.msra.mxu0 0.0
        %502 = vmatprep.subr.mxu0 0.0
        %503 = vmatpush2.msra.mxu0 0.0
        %504 = vmatprep.subr.mxu0 0.0
        %505 = vmatpush2.msra.mxu0 0.0
        %506 = vmatprep.subr.mxu0 0.0
        %507 = vmatpush2.msra.mxu0 0.0
        %508 = vmatprep.subr.mxu0 0.0
        %509 = vmatpush2.msra.mxu0 0.0
        %510 = vmatprep.subr.mxu0 0.0
        %511 = vmatpush2.msra.mxu0 0.0
        %512 = vmatprep.subr.mxu0 0.0
        %513 = vmatpush2.msra.mxu0 0.0
        %514 = vmatprep.subr.mxu0 0.0
        %515 = vmatpush2.msra.mxu0 0.0
        %516 = vmatprep.subr.mxu0 0.0
        %517 = vmatpush2.msra.mxu0 0.0
        %518 = vmatprep.subr.mxu0 0.0
        %519 = vmatpush2.msra.mxu0 0.0
        %520 = vmatprep.subr.mxu0 0.0
        %521 = vmatpush2.msra.mxu0 0.0
        %522 = vmatprep.subr.mxu0 0.0
        %523 = vmatpush2.msra.mxu0 0.0
        %524 = vmatprep.subr.mxu0 0.0
        %525 = vmatpush2.msra.mxu0 0.0
        %526 = vmatprep.subr.mxu0 0.0
        %527 = vmatpush2.msra.mxu0 0.0
        %528 = vmatprep.mubr.f32.mxu0 0.0
        %529 = vmatmul.mubr.f32.gmra.mxu0 %v462
        %v530 = vpop.f32.mrf.mxu0
        %v531 = vadd.f32 0.0, %v530
        %v532 = vpop.f32.mrf.mxu0
        %533 = vmatprep.mubr.f32.mxu0 0.0
        %534 = vmatmul.mubr.f32.gmra.mxu0 %v463
        %v535 = vpop.f32.mrf.mxu0
        %v536 = vadd.f32 0.0, %v535
        %v537 = vpop.f32.mrf.mxu0
        %538 = vdwg.mxu0
        %v539 = vmul.f32 %v531, 0.03125
        %v540 = vmul.f32 %v536, 0.03125
        %v541 = vadd.f32 %v539, 1e-06
        %v542 = vadd.f32 %v540, 1e-06
        %v543 = vrsqrt.pop %v541
        %v544 = vrsqrt.pop %v542
        %545 = vmatprep.subr.mxu0 0.0
        %546 = vmatpush1.msra.mxu0 %v307
        %547 = vmatprep.subr.mxu0 0.0
        %548 = vmatpush1.msra.mxu0 %v306
        %549 = vmatprep.subr.mxu0 0.0
        %550 = vmatpush1.msra.mxu0 %v305
        %551 = vmatprep.subr.mxu0 0.0
        %552 = vmatpush1.msra.mxu0 %v304
        %553 = vmatprep.subr.mxu0 0.0
        %554 = vmatpush1.msra.mxu0 %v303
        %555 = vmatprep.subr.mxu0 0.0
        %556 = vmatpush1.msra.mxu0 %v302
        %557 = vmatprep.subr.mxu0 0.0
        %558 = vmatpush1.msra.mxu0 %v301
        %559 = vmatprep.subr.mxu0 0.0
        %560 = vmatpush1.msra.mxu0 %v300
        %561 = vmatprep.subr.mxu0 0.0
        %562 = vmatpush1.msra.mxu0 %v299
        %563 = vmatprep.subr.mxu0 0.0
        %564 = vmatpush1.msra.mxu0 %v298
        %565 = vmatprep.subr.mxu0 0.0
        %566 = vmatpush1.msra.mxu0 %v297
        %567 = vmatprep.subr.mxu0 0.0
        %568 = vmatpush1.msra.mxu0 %v296
        %569 = vmatprep.subr.mxu0 0.0
        %570 = vmatpush1.msra.mxu0 %v295
        %571 = vmatprep.subr.mxu0 0.0
        %572 = vmatpush1.msra.mxu0 %v294
        %573 = vmatprep.subr.mxu0 0.0
        %574 = vmatpush1.msra.mxu0 %v293
        %575 = vmatprep.subr.mxu0 0.0
        %576 = vmatpush1.msra.mxu0 %v292
        %577 = vmatprep.subr.mxu0 0.0
        %578 = vmatpush2.msra.mxu0 0.0
        %579 = vmatprep.subr.mxu0 0.0
        %580 = vmatpush2.msra.mxu0 0.0
        %581 = vmatprep.subr.mxu0 0.0
        %582 = vmatpush2.msra.mxu0 0.0
        %583 = vmatprep.subr.mxu0 0.0
        %584 = vmatpush2.msra.mxu0 0.0
        %585 = vmatprep.subr.mxu0 0.0
        %586 = vmatpush2.msra.mxu0 0.0
        %587 = vmatprep.subr.mxu0 0.0
        %588 = vmatpush2.msra.mxu0 0.0
        %589 = vmatprep.subr.mxu0 0.0
        %590 = vmatpush2.msra.mxu0 0.0
        %591 = vmatprep.subr.mxu0 0.0
        %592 = vmatpush2.msra.mxu0 0.0
        %593 = vmatprep.subr.mxu0 0.0
        %594 = vmatpush2.msra.mxu0 0.0
        %595 = vmatprep.subr.mxu0 0.0
        %596 = vmatpush2.msra.mxu0 0.0
        %597 = vmatprep.subr.mxu0 0.0
        %598 = vmatpush2.msra.mxu0 0.0
        %599 = vmatprep.subr.mxu0 0.0
        %600 = vmatpush2.msra.mxu0 0.0
        %601 = vmatprep.subr.mxu0 0.0
        %602 = vmatpush2.msra.mxu0 0.0
        %603 = vmatprep.subr.mxu0 0.0
        %604 = vmatpush2.msra.mxu0 0.0
        %605 = vmatprep.subr.mxu0 0.0
        %606 = vmatpush2.msra.mxu0 0.0
        %607 = vmatprep.subr.mxu0 0.0
        %608 = vmatpush2.msra.mxu0 0.0
        %609 = vmatprep.mubr.f32.mxu0 0.0
        %610 = vmatmul.mubr.f32.gmra.mxu0 %v543
        %v611 = vpop.f32.mrf.mxu0
        %v612 = vadd.f32 0.0, %v611
        %v613 = vpop.f32.mrf.mxu0
        %614 = vmatprep.mubr.f32.mxu0 0.0
        %615 = vmatmul.mubr.f32.gmra.mxu0 %v544
        %v616 = vpop.f32.mrf.mxu0
        %v617 = vadd.f32 0.0, %v616
        %v618 = vpop.f32.mrf.mxu0
        %619 = vdwg.mxu0
        %v620 = vmul.f32 %v460, %v612
        %v621 = vmul.f32 %v461, %v617
        %v622 = vld [vmem:[%s1] sm:$0x1]
        %v624 = vlaneseq
        %v625 = vshrl.u32 %v624, 7
        %v626 = vsub.s32 0, %v625
        %v627 = vrot.slane %v622, %v626
        %v629 = vmul.f32 %v620, %v627
        %v630 = vmul.f32 %v621, %v627
        %v631 = vld [vmem:[%s2] sm:$0x1]
        %v633 = vlaneseq
        %v634 = vshrl.u32 %v633, 7
        %v635 = vsub.s32 0, %v634
        %v636 = vrot.slane %v631, %v635
        %v638 = vadd.f32 %v629, %v636
        %v639 = vadd.f32 %v630, %v636
        %640 = vst [vmem:[%s271] sm:$0xff] %v638
        %641 = vst [vmem:[%s271 + $0x8] sm:$0xff] %v639
        %s642 = sand.u32 %s141, 1
        %s643 = scalar_lea.sflag [#allocation4], %s642
        %s644 = sand.u32 %s141, 1
        %s645 = smul.addr %s644, 16
        %s646 = scalar_lea.vmem [#allocation8], %s645
        // Predicated region
        $region53: #{tpu_custom_call.1} parent=39 // pred_check
          %p647 = pneg %p151
        $region54: #{tpu_custom_call.1} parent=39 // pred_check_branch
          %649 = sbr.rel (%p647) target = $region56
        $region55: #{tpu_custom_call.1} parent=39 // pred_region
          %s650 = smul.u32 2, %s23
          %s652 = ssub.s32 256, 256
          %653 = vsyncadd %s643, %s652
          %s654 = smul.addr %s650, 128
          %s655 = scalar_lea.hbm %s5, %s654
          %s656 = sshll.u32 %s646, 4
          %s657 = int_to_ptr.vmem [resolvable:$true] %s656
          %662 = dma.vmem_to_hbm [thread:$0]  %s657, 256, %s655, %s643, 128, 128, 8
        $region56: #{tpu_custom_call.1} parent=39 // pred_fallthru
          _
      $region40: #{tpu_custom_call.1} parent=5 // pred_fallthru
        _
      %p663 = scmp.le.s32.totalorder 2, %s18
      // Predicated region
      $region57: #{tpu_custom_call.1} parent=5 // pred_check
        %p664 = pneg %p663
      $region58: #{tpu_custom_call.1} parent=5 // pred_check_branch
        %666 = sbr.rel (%p664) target = $region60
      $region59: #{tpu_custom_call.1} parent=5 // pred_region
        %s667 = ssub.s32 %s18, 2
        // Predicated region
        $region61: #{tpu_custom_call.1} parent=59 // pred_check
          %p668 = pneg %p157
        $region62: #{tpu_custom_call.1} parent=59 // pred_check_branch
          %670 = sbr.rel (%p668) target = $region64
        $region63: #{tpu_custom_call.1} parent=59 // pred_region
          %s671 = sand.u32 %s142, 1
          %s672 = scalar_lea.sflag [#allocation4], %s671
          %s673 = sand.u32 %s142, 1
          %s674 = smul.addr %s673, 16
          %s675 = scalar_lea.vmem [#allocation8], %s674
          %676 = dma.done %s672, 256
        $region64: #{tpu_custom_call.1} parent=59 // pred_fallthru
          _
      $region60: #{tpu_custom_call.1} parent=5 // pred_fallthru
        _
    $region6: #{tpu_custom_call.1} parent=1 // loop_footer
      %s22 = sadd.s32 1, %s18
    $region7: #{tpu_custom_call.1} parent=1 // loop_footer_branch
      %17 = sbr.rel target = $region3
    $region8: #{tpu_custom_call.1} parent=1 // loop_exit
      _
    %677 = vsyncpa [#allocation3], 1
    %s678 = scalar_lea.sflag [#allocation3], 1
    %679 = vsyncpa %s678, 1
    %680 = vsyncpa [#allocation6], 1
    %681 = vsyncpa [#allocation4], 1
    %s682 = scalar_lea.sflag [#allocation4], 1
    %683 = vsyncpa %s682, 1

</llo_original>
